<compile_context>
chip_gen: v6e
topology: v6e:2x2x1
jax: 0.10.0
libtpu: 0.0.40
codegen_flags: <defaults>
</compile_context>

<pallas_src>
import math

import jax
import jax.numpy as jnp
from jax.experimental import pallas as pl
from jax.experimental.pallas import tpu as pltpu

_TWO_PI = 2.0 * math.pi
_INV_TWO_PI = 1.0 / _TWO_PI
_TWO_PI_HI = 6.28125                   # exact in f32 (few mantissa bits)
_TWO_PI_LO = _TWO_PI - _TWO_PI_HI      # ~1.9353e-3 (Cody-Waite tail)

_TILE_BYTES_TARGET = 2 * 1024 * 1024   # ~2 MiB output tile per grid step


def _round_up(x: int, m: int) -> int:
    return (x + m - 1) // m * m


def _sinusoidal_kernel(freqs_ref, phase_ref, time_ref, out_ref):
    """freqs_ref/phase_ref: (1, DIM) f32, time_ref: (TB, 1) f32, out_ref: (TB, DIM)."""
    t = time_ref[...]                                    # (TB, 1)
    # cos(x) = sin(x + pi/2): one sin per element instead of sin + cos + select.
    # Phase is added BEFORE the range reduction so the reduced arg stays in
    # [-pi, pi] (per review / keeps f32 trig accuracy for ~1e3-rad timesteps).
    args = t * freqs_ref[...] + phase_ref[...]           # (TB, DIM) lane broadcast

    # Cody-Waite range reduction into ~[-pi, pi].
    k = jnp.floor(args * _INV_TWO_PI + 0.5)
    r = args - k * _TWO_PI_HI
    r = r - k * _TWO_PI_LO

    out_ref[...] = jnp.sin(r).astype(out_ref.dtype)


def sinusoidal_position_embeddings(time: jax.Array, dim: int, *,
                                   out_dtype=jnp.float32,
                                   block_b: int = 4096) -> jax.Array:
    """Pallas equivalent of SinusoidalPositionEmbeddings(dim)(time).

    out_dtype=jnp.bfloat16 halves HBM writeback if the consumer takes bf16.
    """
    assert dim % 2 == 0 and dim >= 4, "dim must be even and >= 4"
    half_dim = dim // 2
    b = time.shape[0]

    # Batch tile: multiple of 8 sublanes, capped so one (tb, dim) f32 output
    # tile is ~2 MiB (double-buffered tiles + temporaries fit scoped VMEM even
    # on v5e's 16 MiB default).
    rows_budget = max(8, (_TILE_BYTES_TARGET // (dim * 4)) // 8 * 8)
    tb = min(block_b, rows_budget, _round_up(b, 8))

    t = time.astype(jnp.float32).reshape(b, 1)

    # freqs[j] = exp(-(j mod half_dim) * log(1e4)/(half_dim-1)), phase[j] = 0
    # for j < half_dim (sin half) and pi/2 for j >= half_dim (cos half).
    scale = math.log(10000.0) / (half_dim - 1)
    freqs_half = jnp.exp(jnp.arange(half_dim, dtype=jnp.float32) * (-scale))
    freqs = jnp.concatenate([freqs_half, freqs_half]).reshape(1, dim)
    phase = jnp.concatenate([
        jnp.zeros((half_dim,), jnp.float32),
        jnp.full((half_dim,), math.pi / 2.0, dtype=jnp.float32),
    ]).reshape(1, dim)

    return pl.pallas_call(
        _sinusoidal_kernel,
        out_shape=jax.ShapeDtypeStruct((b, dim), out_dtype),
        grid=(pl.cdiv(b, tb),),
        in_specs=[
            pl.BlockSpec((1, dim), lambda i: (0, 0)),   # VMEM-resident freq row
            pl.BlockSpec((1, dim), lambda i: (0, 0)),   # VMEM-resident phase row
            pl.BlockSpec((tb, 1), lambda i: (i, 0)),
        ],
        out_specs=pl.BlockSpec((tb, dim), lambda i: (i, 0)),
        compiler_params=pltpu.CompilerParams(
            dimension_semantics=("parallel",)),
    )(freqs, phase, t)


def _reference(time: jax.Array, dim: int) -> jax.Array:
    half_dim = dim // 2
    emb = math.log(10000.0) / (half_dim - 1)
    emb = jnp.exp(jnp.arange(half_dim, dtype=jnp.float32) * -emb)
    emb = time.astype(jnp.float32)[:, None] * emb[None, :]
    return jnp.concatenate([jnp.sin(emb), jnp.cos(emb)], axis=-1)


if __name__ == "__main__":
    key = jax.random.PRNGKey(0)
    batch = 8
    dim = 32  # SinusoidalPositionEmbeddings(dim=32)

    # Diffusion timesteps: small non-negative integers, cast to float.
    time = jax.random.randint(key, (batch,), minval=0, maxval=1000).astype(jnp.float32)

    out = jax.block_until_ready(sinusoidal_position_embeddings(time, dim))
    ref = _reference(time, dim)

    assert out.shape == (batch, dim)
    assert out.dtype == jnp.float32
    # Tolerance covers (a) Mosaic-vs-XLA sin/cos implementation differences for
    # ~1e3-rad args and (b) the f32 rounding of the +pi/2 phase add before
    # range reduction (<= ~3e-5 rad at t~1e3).
    assert jnp.allclose(out, ref, atol=2e-4, rtol=2e-4), \
        float(jnp.max(jnp.abs(out - ref)))

    print("KERNEL_OK")
</pallas_src>

<mosaic_0001>
module attributes {stable_mosaic.version = 11 : i64} {
  func.func @_sinusoidal_kernel(%arg0: i32, %arg1: memref<1x32xf32, #tpu.memory_space<vmem>>, %arg2: memref<1x32xf32, #tpu.memory_space<vmem>>, %arg3: memref<8x1xf32, #tpu.memory_space<vmem>>, %arg4: memref<8x32xf32, #tpu.memory_space<vmem>>) attributes {dimension_semantics = [#tpu.dimension_semantics<parallel>], iteration_bounds = array<i64: 1>, scalar_prefetch = 0 : i64, scratch_operands = 0 : i64, tpu.core_type = #tpu.core_type<tc>, window_params = [{pipeline_mode = #tpu.pipeline_mode<synchronous>, transform_indices = @transform_0, window_bounds = array<i64: 1, 32>}, {pipeline_mode = #tpu.pipeline_mode<synchronous>, transform_indices = @transform_1, window_bounds = array<i64: 1, 32>}, {transform_indices = @transform_2, window_bounds = array<i64: 8, 1>}, {transform_indices = @transform_3, window_bounds = array<i64: 8, 32>}]} {
    %c0 = arith.constant 0 : index
    %c0_0 = arith.constant 0 : index
    %0 = vector.load %arg3[%c0, %c0_0] : memref<8x1xf32, #tpu.memory_space<vmem>>, vector<8x1xf32>
    %c0_1 = arith.constant 0 : index
    %c0_2 = arith.constant 0 : index
    %1 = vector.load %arg1[%c0_1, %c0_2] : memref<1x32xf32, #tpu.memory_space<vmem>>, vector<1x32xf32>
    %2 = vector.broadcast %0 : vector<8x1xf32> to vector<8x32xf32>
    %3 = vector.broadcast %1 : vector<1x32xf32> to vector<8x32xf32>
    %4 = arith.mulf %2, %3 : vector<8x32xf32>
    %c0_3 = arith.constant 0 : index
    %c0_4 = arith.constant 0 : index
    %5 = vector.load %arg2[%c0_3, %c0_4] : memref<1x32xf32, #tpu.memory_space<vmem>>, vector<1x32xf32>
    %6 = vector.broadcast %5 : vector<1x32xf32> to vector<8x32xf32>
    %7 = arith.addf %4, %6 : vector<8x32xf32>
    %cst = arith.constant 0.159154937 : f32
    %8 = vector.broadcast %cst : f32 to vector<8x32xf32>
    %9 = arith.mulf %7, %8 : vector<8x32xf32>
    %cst_5 = arith.constant 5.000000e-01 : f32
    %10 = vector.broadcast %cst_5 : f32 to vector<8x32xf32>
    %11 = arith.addf %9, %10 : vector<8x32xf32>
    %12 = math.floor %11 : vector<8x32xf32>
    %cst_6 = arith.constant 6.281250e+00 : f32
    %13 = vector.broadcast %cst_6 : f32 to vector<8x32xf32>
    %14 = arith.mulf %12, %13 : vector<8x32xf32>
    %15 = arith.subf %7, %14 : vector<8x32xf32>
    %cst_7 = arith.constant 0.00193530717 : f32
    %16 = vector.broadcast %cst_7 : f32 to vector<8x32xf32>
    %17 = arith.mulf %12, %16 : vector<8x32xf32>
    %18 = arith.subf %15, %17 : vector<8x32xf32>
    %19 = math.sin %18 : vector<8x32xf32>
    %c0_8 = arith.constant 0 : index
    %c0_9 = arith.constant 0 : index
    %20 = vector.load %arg4[%c0_8, %c0_9] : memref<8x32xf32, #tpu.memory_space<vmem>>, vector<8x32xf32>
    tpu.vector_store %arg4[%c0_8, %c0_9], %19 {strides = array<i32>} : memref<8x32xf32, #tpu.memory_space<vmem>>, vector<8x32xf32>,
    return
  }
  func.func @transform_0(%arg0: i32) -> (i32, i32) {
    %c0_i32 = arith.constant 0 : i32
    %c0_i32_0 = arith.constant 0 : i32
    %c0_i32_1 = arith.constant 0 : i32
    return %c0_i32, %c0_i32_0 : i32, i32
  }
  func.func @transform_1(%arg0: i32) -> (i32, i32) {
    %c0_i32 = arith.constant 0 : i32
    %c0_i32_0 = arith.constant 0 : i32
    %c0_i32_1 = arith.constant 0 : i32
    return %c0_i32, %c0_i32_0 : i32, i32
  }
  func.func @transform_2(%arg0: i32) -> (i32, i32) {
    %c0_i32 = arith.constant 0 : i32
    %c0_i32_0 = arith.constant 0 : i32
    return %arg0, %c0_i32 : i32, i32
  }
  func.func @transform_3(%arg0: i32) -> (i32, i32) {
    %c0_i32 = arith.constant 0 : i32
    %c0_i32_0 = arith.constant 0 : i32
    return %arg0, %c0_i32 : i32, i32
  }
}

</mosaic_0001>

<llo_original>
// kernel: tpu_custom_call.1
$region0: #{tpu_custom_call.1}
  #allocation0 [shape = 'u32[]', space=smem, size = 0x4, offset = 0x4, fixed_abs, tag = 'smem constant byte address 0x4 - core index']
  #allocation1 [shape = 'u32[144,128]{1,0:T(1,128)}', space=vmem, size = 0x12000, scoped, tag = 'internal scratch']
  %s0 = inlined_call_operand.vmem [shape: f32[1,32], index: 0, kind: input, shape index: {}]
  %s1 = inlined_call_operand.vmem [shape: f32[1,32], index: 1, kind: input, shape index: {}]
  %s2 = inlined_call_operand.vmem [shape: f32[8,1], index: 2, kind: input, shape index: {}]
  %s3 = inlined_call_operand.hbm [shape: f32[8,32], index: 3, kind: output, shape index: {}]
  %s4 = sld [smem:[#allocation0]]
  $region22: #{tpu_custom_call.1} parent=0
    _
  %s6 = ssub.s32 1, %s4
  %s7 = scalar_select 0, %s6, %s4
  $region1: #{tpu_custom_call.1} parent=0
    #allocation2 [shape = 'u8[4096]{0}', space=vmem, size = 0x1000, scoped, tag = 'output window, operand 0, single buffered']
    #allocation3 [shape = 's32[1]{0}', space=sflag, size = 0x4, scoped, tag = 'scoped memory for tpu_custom_call.1']
    %8 = vsyncpa [#allocation3], 0
    // Predicated region
    $region2: #{tpu_custom_call.1} parent=1 // pred_check
      _
    $region3: #{tpu_custom_call.1} parent=1 // pred_check_branch
      %10 = sbr.rel (0) target = $region5
    $region4: #{tpu_custom_call.1} parent=1 // pred_region
      _
    $region5: #{tpu_custom_call.1} parent=1 // pred_fallthru
      _
    // Predicated region
    $region6: #{tpu_custom_call.1} parent=1 // pred_check
      _
    $region7: #{tpu_custom_call.1} parent=1 // pred_check_branch
      %12 = sbr.rel (0) target = $region9
    $region8: #{tpu_custom_call.1} parent=1 // pred_region
      _
    $region9: #{tpu_custom_call.1} parent=1 // pred_fallthru
      _
    // Predicated region
    $region10: #{tpu_custom_call.1} parent=1 // pred_check
      _
    $region11: #{tpu_custom_call.1} parent=1 // pred_check_branch
      %14 = sbr.rel (0) target = $region13
    $region12: #{tpu_custom_call.1} parent=1 // pred_region
      _
    $region13: #{tpu_custom_call.1} parent=1 // pred_fallthru
      _
    %v15 = vld [vmem:[%s2] sm:$0xff]
    %v16 = vld [vmem:[%s0] sm:$0x1]
    %18 = vset.pattern.permute.xlu0 0
    %19 = vperm.xlu0 %18, %v15
    %v20 = vpop.permute.xlu0 %19
    %v23 = vlaneseq
    %v24 = vshrl.u32 %v23, 7
    %v25 = vsub.s32 0, %v24
    %v26 = vrot.slane %v16, %v25
    %v28 = vmul.f32 %v20, %v26
    %v29 = vld [vmem:[%s1] sm:$0x1]
    %v31 = vlaneseq
    %v32 = vshrl.u32 %v31, 7
    %v33 = vsub.s32 0, %v32
    %v34 = vrot.slane %v29, %v33
    %v36 = vadd.f32 %v28, %v34
    %v37 = vmul.f32 %v36, 0.15915494
    %v38 = vadd.f32 %v37, 0.5
    %v39 = vfloor.f32 %v38
    %v40 = vmul.f32 %v39, 6.28125
    %v41 = vsub.f32 %v36, %v40
    %v42 = vmul.f32 %v39, 0.0019353072
    %v43 = vsub.f32 %v41, %v42
    %v44 = vand.u32 2147483647, %v43
    %vm45 = vcmp.le.f32.partialorder %v44, 0.7853982
    %vm46 = vcmp.lt.s32.totalorder %v43, 0
    %v47 = vand.u32 %v43, 2139095040
    %v48 = vshrl.u32 %v47, 23
    %v49 = vsub.s32 %v48, 127
    %v50 = vand.u32 2147483647, %v43
    %v51 = vand.u32 %v50, 8388607
    %v52 = vor.u32 %v51, 8388608
    %v53 = vsub.s32 0, %v52
    %v54 = vadd.s32 %v49, 1
    %vm55 = vcmp.gt.s32.totalorder %v54, 0
    %v56 = vsel %vm55, %v54, 0
    %v57 = vshrl.u32 %v56, 5
    %v58 = vand.u32 %v56, 31
    %v59 = vsub.s32 32, %v58
    %v60 = vshrl.u32 683565275, %v59
    %v61 = vshll.u32 683565275, %v58
    %v62 = vshrl.u32 2475754826, %v59
    %v63 = vor.u32 %v61, %v62
    %v64 = vshll.u32 2475754826, %v58
    %v65 = vshrl.u32 2131351028, %v59
    %v66 = vor.u32 %v64, %v65
    %v67 = vshll.u32 2131351028, %v58
    %v68 = vshrl.u32 2102212464, %v59
    %v69 = vor.u32 %v67, %v68
    %v70 = vshll.u32 2102212464, %v58
    %v71 = vshrl.u32 920167782, %v59
    %v72 = vor.u32 %v70, %v71
    %v73 = vshll.u32 920167782, %v58
    %v74 = vshrl.u32 1326507024, %v59
    %v75 = vor.u32 %v73, %v74
    %vm76 = vcmp.lt.s32.totalorder %v57, 1
    %vm77 = vcmp.lt.s32.totalorder %v57, 2
    %vm78 = vcmp.lt.s32.totalorder %v57, 3
    %vm79 = vcmp.lt.s32.totalorder %v57, 4
    %v80 = vsel %vm76, %v60, %v63
    %v81 = vsel %vm79, %v69, 2102212464
    %v82 = vsel %vm78, %v66, %v81
    %v83 = vsel %vm77, %v80, %v82
    %v84 = vsel %vm76, %v63, %v66
    %v85 = vsel %vm79, %v72, 920167782
    %v86 = vsel %vm78, %v69, %v85
    %v87 = vsel %vm77, %v84, %v86
    %v88 = vsel %vm76, %v66, %v69
    %v89 = vsel %vm79, %v75, 1326507024
    %v90 = vsel %vm78, %v72, %v89
    %v91 = vsel %vm77, %v88, %v90
    %v92 = vshll.u32 %v52, 8
    %v93 = vmul.u32.u64.compose %v92, %v91
    %v94 = vextract.low.u32 %v93
    %v95 = vextract.high.u32 %v93
    %v96 = vmul.u32.u64.compose %v92, %v87
    %v97 = vextract.low.u32 %v96
    %v98 = vextract.high.u32 %v96
    %v99 = vmul.u32 %v92, %v83
    %v100 = vadd.s32 %v95, %v97
    %vm101 = vc.u32 %v95, %v97
    %v102 = vadd.s32 %v98, 1
    %v103 = vsel %vm101, %v102, %v98
    %v104 = vadd.s32 %v99, %v103
    %v105 = vadd.s32 %v104, 536870912
    %v106 = vshrl.u32 %v105, 30
    %v107 = vshll.u32 %v106, 30
    %v108 = vsub.s32 %v104, %v107
    %vm109 = vcmp.lt.s32.totalorder %v108, 0
    %v110 = vsub.s32 0, %v108
    %v111 = vsel %vm109, %v110, %v108
    %v112 = vclz %v111
    %v113 = vsub.s32 %v112, 2
    %vm114 = vcmp.gt.s32.totalorder 0, %v113
    %v115 = vsel %vm114, 0, %v113
    %v116 = vsub.s32 32, %v115
    %v117 = vshll.u32 %v108, %v115
    %v118 = vshrl.u32 %v100, %v116
    %v119 = vor.u32 %v117, %v118
    %v120 = vsub.s32 4294967266, %v115
    %v121 = vadd.s32 %v120, 127
    %v122 = vshll.u32 %v121, 23
    %v123 = vor.u32 4788187, %v122
    %v124 = vand.u32 2147483647, %v123
    %v126 = vcvt.s32.f32 %v119
    %v127 = vmul.f32 %v126, %v124
    %v128 = vxor.u32 %v127, 2147483648
    %v129 = vsel %vm46, %v128, %v127
    %v130 = vsub.s32 4, %v106
    %v131 = vsel %vm46, %v130, %v106
    %v132 = vsel %vm45, %v43, %v129
    %v133 = vsel %vm45, 0, %v131
    %v134 = vcosq.f32.pop %v132
    %v135 = vsinq.f32.pop %v132
    %vm136 = vweird.f32 %v43
    %v137 = vadd.s32 %v133, 3
    %v138 = vand.u32 %v137, 3
    %vm139 = vcmp.lt.s32.totalorder %v138, 2
    %vm140 = vcmp.eq.s32.totalorder %v138, 0
    %v141 = vxor.u32 %v135, 2147483648
    %v142 = vsel %vm140, %v134, %v141
    %vm143 = vcmp.eq.s32.totalorder %v138, 2
    %v144 = vxor.u32 %v134, 2147483648
    %v145 = vsel %vm143, %v144, %v135
    %v146 = vsel %vm139, %v142, %v145
    %v147 = vsel %vm136, nan, %v146
    %vm148 = vcmask 261120
    %149 = vst.msk [vmem:[#allocation2] sm:$0xff] %vm148, %v147
    // Predicated region
    $region14: #{tpu_custom_call.1} parent=1 // pred_check
      _
    $region15: #{tpu_custom_call.1} parent=1 // pred_check_branch
      %151 = sbr.rel (0) target = $region17
    $region16: #{tpu_custom_call.1} parent=1 // pred_region
      %s153 = ssub.s32 128, 128
      %154 = vsyncadd [#allocation3], %s153
      %s156 = sshll.u32 [#allocation2], 4
      %s157 = int_to_ptr.vmem [resolvable:$true] %s156
      %159 = dma.vmem_to_hbm [thread:$0]  %s157, 128, %s3, [#allocation3]
    $region17: #{tpu_custom_call.1} parent=1 // pred_fallthru
      _
    // Predicated region
    $region18: #{tpu_custom_call.1} parent=1 // pred_check
      _
    $region19: #{tpu_custom_call.1} parent=1 // pred_check_branch
      %161 = sbr.rel (0) target = $region21
    $region20: #{tpu_custom_call.1} parent=1 // pred_region
      %162 = dma.done [#allocation3], 128
    $region21: #{tpu_custom_call.1} parent=1 // pred_fallthru
      _
    %163 = vsyncpa [#allocation3], 1

</llo_original>
